<compile_context>
chip_gen: v7x
topology: tpu7x:2x2x1
jax: 0.10.0
libtpu: 0.0.40
codegen_flags: <defaults>
</compile_context>

<pallas_src>
from functools import lru_cache

import jax
import jax.numpy as jnp
from jax import lax
from jax.experimental import pallas as pl
from jax.experimental.pallas import tpu as pltpu


def _round_up(x, m):
    return ((x + m - 1) // m) * m


@lru_cache(maxsize=None)
def _roll_matches_np_roll() -> bool:
    """One-time hardware probe pinning down pltpu.roll's sign convention.

    pltpu.roll follows jnp.roll on current JAX; probed defensively so a convention flip
    can never silently mis-wire the 3x3 conv taps.  Cached; run once outside jit.
    """
    def k(x_ref, o_ref):
        o_ref[...] = pltpu.roll(x_ref[...], 1, axis=1)

    x = jnp.tile(jnp.arange(128, dtype=jnp.float32)[None, :], (8, 1))
    y = pl.pallas_call(k, out_shape=jax.ShapeDtypeStruct((8, 128), jnp.float32))(x)
    return bool(y[0, 0] == 127.0)


# --------------------------------------------------------------------------
# Fused encoder kernel factory.  Activations are (C, LANES) values with the flattened,
# zero-padded spatial axis of B_TILE images concatenated on the vreg lane axis.
# --------------------------------------------------------------------------
def _build_fused_kernel(Wp, num_blocks, lanes, CP, CATP, np_roll, mxu_dtype, precision):
    # flat offsets of the 9 taps of a 3x3 conv (row-major ky, kx), relative to center
    taps = [(ky - 1) * Wp + (kx - 1) for ky in range(3) for kx in range(3)]
    dn = (((1,), (0,)), ((), ()))

    def shift_of(d):  # roll amount so that rolled[p] == x[p + d]
        return ((-d) % lanes) if np_roll else (d % lanes)

    def kernel(cat_ref, mask_ref, w0_ref, wres_ref, wcat_ref, sh_ref,
               wf_ref, bf_ref, o_ref):
        mask = mask_ref[...]                                    # (1, LANES), 1.0 on interior

        def conv3x3(x, w_at):
            # x: (K, LANES) value, zero on every non-interior lane.
            # 9 per-tap MXU contractions on pltpu.roll-shifted register operands:
            # no im2col stack, no VMEM stores, every load/store lane-aligned.
            xm = x.astype(mxu_dtype)
            acc = None
            for t, d in enumerate(taps):
                xt = xm if d == 0 else pltpu.roll(xm, shift_of(d), axis=1)
                c = lax.dot_general(w_at(t), xt, dimension_numbers=dn,
                                    preferred_element_type=jnp.float32,
                                    precision=precision)
                acc = c if acc is None else acc + c
            return acc                                           # (CP, LANES) f32

        cat = cat_ref[...]                                       # (CATP, LANES)

        # ---- block 0: Block(3 + L, C) on the [image, message] planes ----
        acc = conv3x3(cat, lambda t: w0_ref[t])
        out = jnp.maximum(acc + sh_ref[0], 0.0) * mask

        ri = ci = 0
        for i in range(1, num_blocks):
            if i % 2 == 0:
                # cat([out, concat]) block: merged [w_out | w_cat] weight, one dot per tap.
                x = jnp.concatenate([out, cat], axis=0)          # (CP + CATP, LANES)
                base, ci = ci * 9, ci + 1
                acc = conv3x3(x, lambda t, b=base: wcat_ref[b + t])
                out = jnp.maximum(acc + sh_ref[i], 0.0) * mask
            else:
                # PreResidualBlock: x + Block(x)
                base, ri = ri * 9, ri + 1
                acc = conv3x3(out, lambda t, b=base: wres_ref[b + t])
                out = (jnp.maximum(acc + sh_ref[i], 0.0) + out) * mask

        # ---- final 1x1 conv (C -> 3), no ReLU ----
        y = lax.dot_general(wf_ref[...], out.astype(mxu_dtype), dimension_numbers=dn,
                            preferred_element_type=jnp.float32, precision=precision)
        y = (y + bf_ref[...]) * mask
        o_ref[...] = y[:3].astype(o_ref.dtype)

    return kernel


def _pick_batch_tile(N, Ppad, max_lanes=2048):
    """Pack as many images per grid step as fit a ~2048-lane slab; prefer an even grid
    (two TensorCores on v7x) when that still allows batching >= 2 images per step."""
    cap = max(1, max_lanes // Ppad)
    cand = [d for d in range(1, N + 1) if N % d == 0 and d <= cap] or [1]
    best = max(cand)
    even = [d for d in cand if d >= 2 and (N // d) % 2 == 0]
    if even:
        best = max(even)
    return best


# --------------------------------------------------------------------------
# Wrapper: layout plumbing (NCHW -> lane-dense padded-flat slabs), weight folding/packing,
# one fused pallas_call over the batch.
# --------------------------------------------------------------------------
def encoder_res_forward(params, image_nchw, message, num_blocks,
                        b_tile=None, use_bf16_mxu=False):
    """image_nchw: (N, 3, H, W) f32; message: (N, L) f32 -> (N, 3, H, W) f32."""
    f32 = jnp.float32
    md = jnp.bfloat16 if use_bf16_mxu else f32
    precision = None if use_bf16_mxu else lax.Precision.HIGHEST

    N, Cimg, H, W = image_nchw.shape
    L = message.shape[-1]
    C = params["blocks"][0]["w"].shape[-1]
    Cin0 = Cimg + L
    Hp, Wp = H + 2, W + 2
    P = Hp * Wp
    Ppad = pl.cdiv(P, 128) * 128
    CP = _round_up(C, 8)            # sublane-native running-channel count
    CATP = _round_up(Cin0, 8)       # sublane-native (image+message) channel count
    CF = 8                          # padded final-layer output rows (only 3 used)

    if b_tile is None:
        b_tile = _pick_batch_tile(N, Ppad)
    assert N % b_tile == 0, "batch must be divisible by b_tile"
    lanes = b_tile * Ppad

    # ---- lane-dense inputs: [image | message] planes in padded-flat (CATP, N*Ppad) ----
    idx = jnp.arange(Ppad)
    yy, xx = idx // Wp, idx % Wp
    interior = (idx < P) & (yy >= 1) & (yy <= H) & (xx >= 1) & (xx <= W)
    mask1 = interior.astype(f32)[None, :]                        # (1, Ppad)
    mask_t = jnp.tile(mask1, (1, b_tile))                        # (1, LANES)

    img_p = jnp.pad(image_nchw.astype(f32), ((0, 0), (0, 0), (1, 1), (1, 1)))
    img_p = jnp.pad(img_p.reshape(N, Cimg, P), ((0, 0), (0, 0), (0, Ppad - P)))
    msg_p = message.astype(f32)[:, :, None] * mask1[None]        # (N, L, Ppad)
    catp = jnp.concatenate([img_p, msg_p], axis=1)               # (N, Cin0, Ppad)
    catp = jnp.pad(catp, ((0, 0), (0, CATP - Cin0), (0, 0)))
    catp = jnp.transpose(catp, (1, 0, 2)).reshape(CATP, N * Ppad)

    # ---- fold BN scale into the conv weights; pack all params into 6 stacked arrays ----
    def fold(blk, cin, cinp):
        wt = jnp.transpose(blk["w"].astype(f32), (0, 2, 1))      # (9, C, cin)
        wt = wt * blk["scale"].astype(f32)[None, :, None]        # BN scale folded in
        return jnp.pad(wt, ((0, 0), (0, CP - C), (0, cinp - cin)))

    def pad_shift(sh):
        return jnp.pad(sh.astype(f32), (0, CP - C)).reshape(CP, 1)

    blk0 = params["blocks"][0]
    w0 = fold(blk0, Cin0, CATP)                                  # (9, CP, CATP)
    shifts, res_w, cat_w = [pad_shift(blk0["shift"])], [], []
    for i in range(1, num_blocks):
        blk = params["blocks"][i]
        if i % 2 == 0:                                           # cat([out, concat]) block
            wt = jnp.transpose(blk["w"].astype(f32), (0, 2, 1))  # (9, C, C + Cin0)
            wt = wt * blk["scale"].astype(f32)[None, :, None]
            w_out = jnp.pad(wt[:, :, :C], ((0, 0), (0, CP - C), (0, CP - C)))
            w_ct = jnp.pad(wt[:, :, C:], ((0, 0), (0, CP - C), (0, CATP - Cin0)))
            cat_w.append(jnp.concatenate([w_out, w_ct], axis=2)) # (9, CP, CP+CATP)
        else:                                                    # residual block
            res_w.append(fold(blk, C, CP))
        shifts.append(pad_shift(blk["shift"]))
    w_res = (jnp.concatenate(res_w, axis=0) if res_w
             else jnp.zeros((9, CP, CP), f32))                   # (9*n_res, CP, CP)
    w_cat = (jnp.concatenate(cat_w, axis=0) if cat_w
             else jnp.zeros((9, CP, CP + CATP), f32))            # (9*n_cat, CP, CP+CATP)
    shifts = jnp.stack(shifts)                                   # (num_blocks, CP, 1)

    fin = params["final"]
    wf = jnp.transpose(fin["w"].astype(f32)[0]) * fin["scale"].astype(f32)[:, None]
    wf = jnp.pad(wf, ((0, CF - 3), (0, CP - C)))                 # (CF, CP)
    bf = jnp.pad(fin["shift"].astype(f32), (0, CF - 3)).reshape(CF, 1)

    w0, w_res, w_cat, wf = (a.astype(md) for a in (w0, w_res, w_cat, wf))

    kernel = _build_fused_kernel(Wp, num_blocks, lanes, CP, CATP,
                                 _roll_matches_np_roll(), md, precision)

    params_arrays = [w0, w_res, w_cat, shifts, wf, bf]
    param_specs = [pl.BlockSpec(a.shape, lambda g, nd=a.ndim: (0,) * nd)
                   for a in params_arrays]

    out_flat = pl.pallas_call(
        kernel,
        out_shape=jax.ShapeDtypeStruct((3, N * Ppad), f32),
        grid=(N // b_tile,),
        in_specs=[pl.BlockSpec((CATP, lanes), lambda g: (0, g)),
                  pl.BlockSpec((1, lanes), lambda g: (0, 0))] + param_specs,
        out_specs=pl.BlockSpec((3, lanes), lambda g: (0, g)),
        compiler_params=pltpu.CompilerParams(
            dimension_semantics=("parallel",)),                  # batch across TCs on v7x
    )(catp, mask_t, *params_arrays)

    # drop lane padding / halo -> NCHW
    out = out_flat.reshape(3, N, Ppad).transpose(1, 0, 2)[:, :, :P]
    return out.reshape(N, 3, Hp, Wp)[:, :, 1:1 + H, 1:1 + W]


# --------------------------------------------------------------------------
# Parameter construction (deterministic, mirrors EncoderRes.__init__ shapes)
# --------------------------------------------------------------------------
def _block_params(key, cin, cout):
    k1, k2, k3, k4 = jax.random.split(key, 4)
    w = 0.1 * jax.random.normal(k1, (9, cin, cout), jnp.float32)      # conv 3x3
    b = 0.1 * jax.random.normal(k2, (cout,), jnp.float32)             # conv bias
    gamma = 1.0 + 0.1 * jax.random.normal(k3, (cout,), jnp.float32)   # BN weight
    beta = 0.1 * jax.random.normal(k4, (cout,), jnp.float32)          # BN bias
    mean = jnp.zeros((cout,), jnp.float32)
    var = jnp.ones((cout,), jnp.float32)
    eps = 1e-5
    scale = gamma / jnp.sqrt(var + eps)
    shift = scale * (b - mean) + beta
    return {"w": w, "scale": scale, "shift": shift}


def init_params(key, num_blocks, num_channels, message_length):
    cin0 = 3 + message_length
    keys = jax.random.split(key, num_blocks + 1)
    blocks = [_block_params(keys[0], cin0, num_channels)]
    for i in range(1, num_blocks):
        cin = num_channels + cin0 if i % 2 == 0 else num_channels
        blocks.append(_block_params(keys[i], cin, num_channels))
    kf1, kf2 = jax.random.split(keys[-1], 2)
    fw = 0.1 * jax.random.normal(kf1, (1, num_channels, 3), jnp.float32)
    fb = 0.1 * jax.random.normal(kf2, (3,), jnp.float32)
    final = {"w": fw, "scale": jnp.ones((3,), jnp.float32), "shift": fb}
    return {"blocks": blocks, "final": final}


# --------------------------------------------------------------------------
# Pure-JAX reference (correctness check), NCHW like the PyTorch module.
# --------------------------------------------------------------------------
def _ref_conv(x, w9, scale, shift, ksize, relu, residual=None):
    cin, cout = w9.shape[1], w9.shape[2]
    whwio = w9.reshape(ksize, ksize, cin, cout)
    y = lax.conv_general_dilated(
        x, whwio, window_strides=(1, 1),
        padding="SAME" if ksize == 3 else "VALID",
        dimension_numbers=("NCHW", "HWIO", "NCHW"),
        precision=lax.Precision.HIGHEST)
    y = y * scale[None, :, None, None] + shift[None, :, None, None]
    if relu:
        y = jnp.maximum(y, 0.0)
    if residual is not None:
        y = y + residual
    return y


def ref_forward(params, image_nchw, message, num_blocks):
    N, _, H, W = image_nchw.shape
    L = message.shape[-1]
    msg = jnp.broadcast_to(message[:, :, None, None], (N, L, H, W))
    concat = jnp.concatenate([image_nchw, msg], axis=1)
    blk0 = params["blocks"][0]
    out = _ref_conv(concat, blk0["w"], blk0["scale"], blk0["shift"], 3, True)
    for i in range(1, num_blocks):
        blk = params["blocks"][i]
        if i % 2 == 0:
            out = jnp.concatenate([out, concat], axis=1)
            out = _ref_conv(out, blk["w"], blk["scale"], blk["shift"], 3, True)
        else:
            out = _ref_conv(out, blk["w"], blk["scale"], blk["shift"], 3, True, residual=out)
    fin = params["final"]
    return _ref_conv(out, fin["w"], fin["scale"], fin["shift"], 1, False)


if __name__ == "__main__":
    N, H, W = 2, 16, 16
    num_blocks, num_channels, message_length = 5, 4, 8

    key = jax.random.PRNGKey(0)
    k_img, k_msg, k_par = jax.random.split(key, 3)
    image = jax.random.normal(k_img, (N, 3, H, W), jnp.float32)       # NCHW, like PyTorch
    message = jax.random.normal(k_msg, (N, message_length), jnp.float32)
    params = init_params(k_par, num_blocks, num_channels, message_length)

    _roll_matches_np_roll()   # warm the one-time roll-direction probe outside jit

    fwd = jax.jit(encoder_res_forward,
                  static_argnames=("num_blocks", "b_tile", "use_bf16_mxu"))
    out = fwd(params, image, message, num_blocks=num_blocks)
    jax.block_until_ready(out)

    ref = ref_forward(params, image, message, num_blocks)
    assert out.shape == (N, 3, H, W)
    max_err = float(jnp.max(jnp.abs(out - ref)))
    assert jnp.allclose(out, ref, atol=1e-3, rtol=1e-3), \
        f"mismatch vs reference (max abs err {max_err:.3e})"

    print("KERNEL_OK")
</pallas_src>

<mosaic_0001>
module attributes {stable_mosaic.version = 11 : i64} {
  func.func @k(%arg0: memref<8x128xf32, #tpu.memory_space<vmem>>, %arg1: memref<8x128xf32, #tpu.memory_space<vmem>>) attributes {dimension_semantics = [], scalar_prefetch = 0 : i64, scratch_operands = 0 : i64, tpu.core_type = #tpu.core_type<tc>} {
    %c0 = arith.constant 0 : index
    %c0_0 = arith.constant 0 : index
    %0 = vector.load %arg0[%c0, %c0_0] : memref<8x128xf32, #tpu.memory_space<vmem>>, vector<8x128xf32>
    %c1_i32 = arith.constant 1 : i32
    %1 = tpu.dynamic_rotate %0 by %c1_i32 dim 1 : vector<8x128xf32>, i32 -> vector<8x128xf32>
    %c0_1 = arith.constant 0 : index
    %c0_2 = arith.constant 0 : index
    %2 = vector.load %arg1[%c0_1, %c0_2] : memref<8x128xf32, #tpu.memory_space<vmem>>, vector<8x128xf32>
    tpu.vector_store %arg1[%c0_1, %c0_2], %1 {strides = array<i32>} : memref<8x128xf32, #tpu.memory_space<vmem>>, vector<8x128xf32>,
    return
  }
}

</mosaic_0001>

<llo_original>
// kernel: tpu_custom_call.1
$region0: #{tpu_custom_call.1}
  #allocation0 [shape = 'u32[]', space=smem, size = 0x4, offset = 0x4, fixed_abs, tag = 'smem constant byte address 0x4 - core index']
  #allocation1 [shape = 'u32[144,128]{1,0:T(1,128)}', space=vmem, size = 0x12000, scoped, tag = 'internal scratch']
  %s0 = inlined_call_operand.hbm [shape: f32[8,128], index: 0, kind: input, shape index: {}]
  %s1 = inlined_call_operand.hbm [shape: f32[8,128], index: 1, kind: output, shape index: {}]
  %s2 = sld [smem:[#allocation0]]
  $region18: #{tpu_custom_call.1} parent=0
    _
  %s4 = ssub.s32 1, %s2
  %s5 = scalar_select 0, %s4, %s2
  $region1: #{tpu_custom_call.1} parent=0
    #allocation2 [shape = 'u8[4096]{0}', space=vmem, size = 0x1000, scoped, tag = 'input window, operand 0, single buffered']
    #allocation3 [shape = 's32[1]{0}', space=sflag, size = 0x4, scoped, tag = 'scoped memory for tpu_custom_call.1']
    #allocation4 [shape = 's32[1]{0}', space=sflag, size = 0x4, scoped, tag = 'scoped memory for tpu_custom_call.1']
    #allocation5 [shape = 'u8[4096]{0}', space=vmem, size = 0x1000, scoped, tag = 'output window, operand 0, single buffered']
    %6 = vsyncpa [#allocation3], 0
    %7 = vsyncpa [#allocation4], 0
    // Predicated region
    $region2: #{tpu_custom_call.1} parent=1 // pred_check
      _
    $region3: #{tpu_custom_call.1} parent=1 // pred_check_branch
      %9 = sbr.rel (0) target = $region5
    $region4: #{tpu_custom_call.1} parent=1 // pred_region
      %s11 = ssub.s32 128, 128
      %12 = vsyncadd [#allocation3], %s11
      %s14 = sshll.u32 [#allocation2], 4
      %s15 = int_to_ptr.vmem [resolvable:$true] %s14
      %17 = dma.hbm_to_vmem [thread:$0]  %s0, 128, %s15, [#allocation3]
    $region5: #{tpu_custom_call.1} parent=1 // pred_fallthru
      _
    // Predicated region
    $region6: #{tpu_custom_call.1} parent=1 // pred_check
      _
    $region7: #{tpu_custom_call.1} parent=1 // pred_check_branch
      %19 = sbr.rel (0) target = $region9
    $region8: #{tpu_custom_call.1} parent=1 // pred_region
      %20 = dma.done [#allocation3], 128
    $region9: #{tpu_custom_call.1} parent=1 // pred_fallthru
      _
    %v21 = vld [vmem:[#allocation2] sm:$0xff]
    %22 = vrot.lane.b32.xlu0 %v21, 1
    %v23 = vpop.permute.xlu0 %22
    %24 = vst [vmem:[#allocation5] sm:$0xff] %v23
    // Predicated region
    $region10: #{tpu_custom_call.1} parent=1 // pred_check
      _
    $region11: #{tpu_custom_call.1} parent=1 // pred_check_branch
      %26 = sbr.rel (0) target = $region13
    $region12: #{tpu_custom_call.1} parent=1 // pred_region
      %s28 = ssub.s32 128, 128
      %29 = vsyncadd [#allocation4], %s28
      %s31 = sshll.u32 [#allocation5], 4
      %s32 = int_to_ptr.vmem [resolvable:$true] %s31
      %34 = dma.vmem_to_hbm [thread:$0]  %s32, 128, %s1, [#allocation4]
    $region13: #{tpu_custom_call.1} parent=1 // pred_fallthru
      _
    // Predicated region
    $region14: #{tpu_custom_call.1} parent=1 // pred_check
      _
    $region15: #{tpu_custom_call.1} parent=1 // pred_check_branch
      %36 = sbr.rel (0) target = $region17
    $region16: #{tpu_custom_call.1} parent=1 // pred_region
      %37 = dma.done [#allocation4], 128
    $region17: #{tpu_custom_call.1} parent=1 // pred_fallthru
      _
    %38 = vsyncpa [#allocation3], 1
    %39 = vsyncpa [#allocation4], 1

</llo_original>
